<compile_context>
chip_gen: v6e
topology: v6e:2x2x1
jax: 0.10.0
libtpu: 0.0.40
codegen_flags: <defaults>
</compile_context>

<pallas_src>
import functools

import jax
import jax.numpy as jnp
from jax.experimental import pallas as pl
from jax.experimental.pallas import tpu as pltpu


def _hidden_relu(xT, w1, b1):
    """Layer 1 + ReLU as D broadcast-FMAs on the VPU (K = D is tiny)."""
    D = xT.shape[0]
    hT = b1 + w1[:, 0:1] * xT[0:1, :]              # [H, Bt]
    for k in range(1, D):                          # D small & static -> unrolled
        hT = hT + w1[:, k:k + 1] * xT[k:k + 1, :]
    return jnp.maximum(hT, 0.0)


def policy_kernel_2act(xT_ref, w1_ref, b1_ref, dw_ref, db_ref, o_ref):
    """Two-action path: softmax over 2 classes == sigmoid(s0 - s1).

    xT_ref: [D, Bt]  states (transposed, batch on lanes)
    w1_ref: [H, D]   linear1 weight (torch layout)
    b1_ref: [H, 1]   linear1 bias (column)
    dw_ref: [H, 1]   w2[0,:] - w2[1,:]  (precomputed, column)
    db_ref: [1, 1]   b2[0] - b2[1]      (SMEM scalar)
    o_ref : [2, Bt]  probabilities (transposed, lane-dense)
    """
    hT = _hidden_relu(xT_ref[...], w1_ref[...], b1_ref[...])        # [H, Bt]

    d = jnp.sum(dw_ref[...] * hT, axis=0, keepdims=True) + db_ref[0, 0]  # [1, Bt]
    t = 1.0 + jnp.exp(-d)
    r = pl.reciprocal(t, approx=True)              # EUP (free slot)
    r = r * (2.0 - t * r)                          # one Newton step on the VPU
    # Single lane-dense [2, Bt] store (p0 on sublane 0, p1 on sublane 1).
    o_ref[...] = jnp.concatenate([r, 1.0 - r], axis=0).astype(o_ref.dtype)


def policy_kernel_general(xT_ref, w1_ref, b1_ref, w2_ref, b2_ref, o_ref):
    """General action count: stable softmax over the class (sublane) axis.

    w2_ref: [H, A]   linear2 weight (transposed torch layout)
    b2_ref: [A, 1]   linear2 bias (column)
    o_ref : [A, Bt]
    """
    hT = _hidden_relu(xT_ref[...], w1_ref[...], b1_ref[...])        # [H, Bt]
    w2 = w2_ref[...]
    b2 = b2_ref[...]
    A = o_ref.shape[0]

    if A <= 8:
        # Tiny contraction: keep it on the VPU/XLU (skip MXU push/drain).
        rows = [jnp.sum(w2[:, a:a + 1] * hT, axis=0, keepdims=True)
                for a in range(A)]
        sT = jnp.concatenate(rows, axis=0) + b2                      # [A, Bt]
    else:
        sT = jax.lax.dot_general(
            w2, hT, (((0,), (0,)), ((), ())),
            preferred_element_type=jnp.float32) + b2                 # [A, Bt]

    m = jnp.max(sT, axis=0, keepdims=True)
    e = jnp.exp(sT - m)
    denom = jnp.sum(e, axis=0, keepdims=True)
    r = pl.reciprocal(denom, approx=True)
    r = r * (2.0 - denom * r)                       # Newton refinement
    o_ref[...] = (e * r).astype(o_ref.dtype)


def _forward_t(x, w1, b1, w2, b2, b_tile_max):
    """Returns probabilities transposed: [A, B]."""
    B, D = x.shape
    H = w1.shape[0]
    A = w2.shape[0]

    # Batch tile: lane-dense (multiple of 128), as large as useful, but derived
    # from B so the grid keeps >= 2 steps when B > 128 (megacore on v7x).
    b_tile_max = max(128, (b_tile_max // 128) * 128)
    half = pl.cdiv(pl.cdiv(B, 2), 128) * 128
    b_tile = max(128, min(b_tile_max, half))
    grid = (pl.cdiv(B, b_tile),)

    # Single wrapper relayout: batch onto the lane axis.  No padding -- the
    # ragged last tile's out-of-bounds lanes are lane-local garbage (possibly
    # NaN after exp) and are masked away on the output write-back.
    xT = x.T.astype(jnp.float32)                    # [D, B]
    w1f = w1.astype(jnp.float32)
    b1c = b1.reshape(H, 1).astype(jnp.float32)

    cost = pl.CostEstimate(
        flops=2 * B * (D * H + H * A),
        transcendentals=B * (1 if A == 2 else A),
        bytes_accessed=4 * (D * B + A * B + H * D + H + H * A + A),
    )
    full = lambda shp: pl.BlockSpec(shp, lambda i: (0,) * len(shp))
    cparams = pltpu.CompilerParams(dimension_semantics=("parallel",))

    if A == 2:
        # Batch-invariant precompute: only the logit difference is needed.
        dw = (w2[0, :] - w2[1, :]).reshape(H, 1).astype(jnp.float32)
        db = (b2[0] - b2[1]).reshape(1, 1).astype(jnp.float32)
        return pl.pallas_call(
            policy_kernel_2act,
            out_shape=jax.ShapeDtypeStruct((A, B), jnp.float32),
            grid=grid,
            in_specs=[
                pl.BlockSpec((D, b_tile), lambda i: (0, i)),     # batch tile
                full((H, D)),                                    # w1 (VMEM resident)
                full((H, 1)),                                    # b1
                full((H, 1)),                                    # dw
                pl.BlockSpec(memory_space=pltpu.MemorySpace.SMEM),  # db scalar
            ],
            out_specs=pl.BlockSpec((A, b_tile), lambda i: (0, i)),
            compiler_params=cparams,
            cost_estimate=cost,
        )(xT, w1f, b1c, dw, db)

    w2n = w2.T.astype(jnp.float32)                  # [H, A]
    b2c = b2.reshape(A, 1).astype(jnp.float32)
    return pl.pallas_call(
        policy_kernel_general,
        out_shape=jax.ShapeDtypeStruct((A, B), jnp.float32),
        grid=grid,
        in_specs=[
            pl.BlockSpec((D, b_tile), lambda i: (0, i)),
            full((H, D)),
            full((H, 1)),
            full((H, A)),
            full((A, 1)),
        ],
        out_specs=pl.BlockSpec((A, b_tile), lambda i: (0, i)),
        compiler_params=cparams,
        cost_estimate=cost,
    )(xT, w1f, b1c, w2n, b2c)


@functools.partial(jax.jit, static_argnames=("b_tile_max",))
def policy_forward(x, w1, b1, w2, b2, *, b_tile_max=4096):
    """probs = softmax(relu(x @ w1.T + b1) @ w2.T + b2, axis=1) -> [B, A].

    Matches Policy.forward's layout (one output relayout).  For rollout loops
    prefer `policy_forward_t`, which returns [A, B] with no relayout.
    """
    return _forward_t(x, w1, b1, w2, b2, b_tile_max).T


@functools.partial(jax.jit, static_argnames=("b_tile_max",))
def policy_forward_t(x, w1, b1, w2, b2, *, b_tile_max=4096):
    """Transposed probabilities [A, B] straight out of the kernel."""
    return _forward_t(x, w1, b1, w2, b2, b_tile_max)


def init_params(key, num_inputs, hidden_size, num_actions):
    # torch.nn.Linear default init U(-1/sqrt(fan_in), 1/sqrt(fan_in)), torch layouts.
    k1, k2, k3, k4 = jax.random.split(key, 4)
    bound1 = 1.0 / jnp.sqrt(num_inputs)
    bound2 = 1.0 / jnp.sqrt(hidden_size)
    w1 = jax.random.uniform(k1, (hidden_size, num_inputs), jnp.float32, -bound1, bound1)
    b1 = jax.random.uniform(k2, (hidden_size,), jnp.float32, -bound1, bound1)
    w2 = jax.random.uniform(k3, (num_actions, hidden_size), jnp.float32, -bound2, bound2)
    b2 = jax.random.uniform(k4, (num_actions,), jnp.float32, -bound2, bound2)
    return w1, b1, w2, b2


def _reference(x, w1, b1, w2, b2):
    hp = jax.lax.Precision.HIGHEST
    h = jnp.maximum(jnp.dot(x, w1.T, precision=hp) + b1[None, :], 0.0)
    s = jnp.dot(h, w2.T, precision=hp) + b2[None, :]
    return jax.nn.softmax(s, axis=1)


if __name__ == "__main__":
    num_inputs, hidden_size, num_actions = 4, 32, 2

    key = jax.random.PRNGKey(0)
    kx1, kx2, kx3, kp, kp3 = jax.random.split(key, 5)
    w1, b1, w2, b2 = init_params(kp, num_inputs, hidden_size, num_actions)

    # Case 1: tiny CartPole-style batch (single ragged 128-lane tile, A==2 path).
    x_small = jax.random.normal(kx1, (2, num_inputs), dtype=jnp.float32)
    out_small = jax.block_until_ready(policy_forward(x_small, w1, b1, w2, b2))
    ref_small = _reference(x_small, w1, b1, w2, b2)
    assert out_small.shape == (2, num_actions)
    assert jnp.allclose(out_small, ref_small, atol=1e-5), (out_small, ref_small)
    assert jnp.allclose(jnp.sum(out_small, axis=1), 1.0, atol=1e-5)

    # Case 2: batched rollout (1000 states -> two 512-wide "parallel" tiles).
    x_big = jax.random.normal(kx2, (1000, num_inputs), dtype=jnp.float32)
    out_big = jax.block_until_ready(policy_forward(x_big, w1, b1, w2, b2))
    ref_big = _reference(x_big, w1, b1, w2, b2)
    assert out_big.shape == (1000, num_actions)
    assert jnp.allclose(out_big, ref_big, atol=1e-5)
    assert jnp.allclose(jnp.sum(out_big, axis=1), 1.0, atol=1e-5)
    # Transposed entry point agrees (no output relayout path).
    out_big_t = jax.block_until_ready(policy_forward_t(x_big, w1, b1, w2, b2))
    assert jnp.allclose(out_big_t.T, ref_big, atol=1e-5)

    # Case 3: general action count (A=3) exercises the VPU layer-2 + softmax path.
    w1g, b1g, w2g, b2g = init_params(kp3, num_inputs, hidden_size, 3)
    x_gen = jax.random.normal(kx3, (200, num_inputs), dtype=jnp.float32)
    out_gen = jax.block_until_ready(policy_forward(x_gen, w1g, b1g, w2g, b2g))
    ref_gen = _reference(x_gen, w1g, b1g, w2g, b2g)
    assert out_gen.shape == (200, 3)
    assert jnp.allclose(out_gen, ref_gen, atol=1e-5)
    assert jnp.allclose(jnp.sum(out_gen, axis=1), 1.0, atol=1e-5)

    print("KERNEL_OK")
</pallas_src>

<mosaic_0001>
module attributes {stable_mosaic.version = 11 : i64} {
  func.func @policy_kernel_2act(%arg0: i32, %arg1: memref<4x128xf32, #tpu.memory_space<vmem>>, %arg2: memref<32x4xf32, #tpu.memory_space<vmem>>, %arg3: memref<32x1xf32, #tpu.memory_space<vmem>>, %arg4: memref<32x1xf32, #tpu.memory_space<vmem>>, %arg5: memref<1x1xf32, #tpu.memory_space<smem>>, %arg6: memref<2x128xf32, #tpu.memory_space<vmem>>) attributes {dimension_semantics = [#tpu.dimension_semantics<parallel>], iteration_bounds = array<i64: 1>, scalar_prefetch = 0 : i64, scratch_operands = 0 : i64, tpu.core_type = #tpu.core_type<tc>, window_params = [{transform_indices = @transform_0, window_bounds = array<i64: 4, 128>}, {pipeline_mode = #tpu.pipeline_mode<synchronous>, transform_indices = @transform_1, window_bounds = array<i64: 32, 4>}, {pipeline_mode = #tpu.pipeline_mode<synchronous>, transform_indices = @transform_2, window_bounds = array<i64: 32, 1>}, {pipeline_mode = #tpu.pipeline_mode<synchronous>, transform_indices = @transform_3, window_bounds = array<i64: 32, 1>}, {transform_indices = @transform_4, window_bounds = array<i64: 1, 1>}, {transform_indices = @transform_5, window_bounds = array<i64: 2, 128>}]} {
    %c0 = arith.constant 0 : index
    %c0_0 = arith.constant 0 : index
    %0 = vector.load %arg1[%c0, %c0_0] : memref<4x128xf32, #tpu.memory_space<vmem>>, vector<4x128xf32>
    %c0_1 = arith.constant 0 : index
    %c0_2 = arith.constant 0 : index
    %1 = vector.load %arg2[%c0_1, %c0_2] : memref<32x4xf32, #tpu.memory_space<vmem>>, vector<32x4xf32>
    %c0_3 = arith.constant 0 : index
    %c0_4 = arith.constant 0 : index
    %2 = vector.load %arg3[%c0_3, %c0_4] : memref<32x1xf32, #tpu.memory_space<vmem>>, vector<32x1xf32>
    %3 = vector.extract_strided_slice %1 {offsets = [0, 0], sizes = [32, 1], strides = [1, 1]} : vector<32x4xf32> to vector<32x1xf32>
    %4 = vector.extract_strided_slice %0 {offsets = [0, 0], sizes = [1, 128], strides = [1, 1]} : vector<4x128xf32> to vector<1x128xf32>
    %5 = vector.broadcast %3 : vector<32x1xf32> to vector<32x128xf32>
    %6 = vector.broadcast %4 : vector<1x128xf32> to vector<32x128xf32>
    %7 = arith.mulf %5, %6 : vector<32x128xf32>
    %8 = vector.broadcast %2 : vector<32x1xf32> to vector<32x128xf32>
    %9 = arith.addf %8, %7 : vector<32x128xf32>
    %10 = vector.extract_strided_slice %1 {offsets = [0, 1], sizes = [32, 1], strides = [1, 1]} : vector<32x4xf32> to vector<32x1xf32>
    %11 = vector.extract_strided_slice %0 {offsets = [1, 0], sizes = [1, 128], strides = [1, 1]} : vector<4x128xf32> to vector<1x128xf32>
    %12 = vector.broadcast %10 : vector<32x1xf32> to vector<32x128xf32>
    %13 = vector.broadcast %11 : vector<1x128xf32> to vector<32x128xf32>
    %14 = arith.mulf %12, %13 : vector<32x128xf32>
    %15 = arith.addf %9, %14 : vector<32x128xf32>
    %16 = vector.extract_strided_slice %1 {offsets = [0, 2], sizes = [32, 1], strides = [1, 1]} : vector<32x4xf32> to vector<32x1xf32>
    %17 = vector.extract_strided_slice %0 {offsets = [2, 0], sizes = [1, 128], strides = [1, 1]} : vector<4x128xf32> to vector<1x128xf32>
    %18 = vector.broadcast %16 : vector<32x1xf32> to vector<32x128xf32>
    %19 = vector.broadcast %17 : vector<1x128xf32> to vector<32x128xf32>
    %20 = arith.mulf %18, %19 : vector<32x128xf32>
    %21 = arith.addf %15, %20 : vector<32x128xf32>
    %22 = vector.extract_strided_slice %1 {offsets = [0, 3], sizes = [32, 1], strides = [1, 1]} : vector<32x4xf32> to vector<32x1xf32>
    %23 = vector.extract_strided_slice %0 {offsets = [3, 0], sizes = [1, 128], strides = [1, 1]} : vector<4x128xf32> to vector<1x128xf32>
    %24 = vector.broadcast %22 : vector<32x1xf32> to vector<32x128xf32>
    %25 = vector.broadcast %23 : vector<1x128xf32> to vector<32x128xf32>
    %26 = arith.mulf %24, %25 : vector<32x128xf32>
    %27 = arith.addf %21, %26 : vector<32x128xf32>
    %cst = arith.constant 0.000000e+00 : f32
    %28 = vector.broadcast %cst : f32 to vector<32x128xf32>
    %29 = arith.maximumf %27, %28 : vector<32x128xf32>
    %c0_5 = arith.constant 0 : index
    %c0_6 = arith.constant 0 : index
    %30 = vector.load %arg4[%c0_5, %c0_6] : memref<32x1xf32, #tpu.memory_space<vmem>>, vector<32x1xf32>
    %31 = vector.broadcast %30 : vector<32x1xf32> to vector<32x128xf32>
    %32 = arith.mulf %31, %29 : vector<32x128xf32>
    %cst_7 = arith.constant dense<0.000000e+00> : vector<128xf32>
    %33 = vector.multi_reduction <add>, %32, %cst_7 [0] : vector<32x128xf32> to vector<128xf32>
    %34 = vector.shape_cast %33 : vector<128xf32> to vector<1x128xf32>
    %c0_8 = arith.constant 0 : index
    %c0_9 = arith.constant 0 : index
    %35 = memref.load %arg5[%c0_8, %c0_9] : memref<1x1xf32, #tpu.memory_space<smem>>
    %36 = vector.broadcast %35 : f32 to vector<1x128xf32>
    %37 = arith.addf %34, %36 : vector<1x128xf32>
    %cst_10 = arith.constant 0.000000e+00 : f32
    %38 = vector.broadcast %cst_10 : f32 to vector<1x128xf32>
    %39 = arith.subf %38, %37 : vector<1x128xf32>
    %40 = math.exp %39 : vector<1x128xf32>
    %cst_11 = arith.constant 1.000000e+00 : f32
    %41 = vector.broadcast %cst_11 : f32 to vector<1x128xf32>
    %42 = arith.addf %41, %40 : vector<1x128xf32>
    %43 = tpu.reciprocal %42 {approx = true} : vector<1x128xf32> -> vector<1x128xf32>
    %44 = arith.mulf %42, %43 : vector<1x128xf32>
    %cst_12 = arith.constant 2.000000e+00 : f32
    %45 = vector.broadcast %cst_12 : f32 to vector<1x128xf32>
    %46 = arith.subf %45, %44 : vector<1x128xf32>
    %47 = arith.mulf %43, %46 : vector<1x128xf32>
    %cst_13 = arith.constant 1.000000e+00 : f32
    %48 = vector.broadcast %cst_13 : f32 to vector<1x128xf32>
    %49 = arith.subf %48, %47 : vector<1x128xf32>
    %50 = tpu.concatenate %47, %49 in 0 : vector<1x128xf32>, vector<1x128xf32> -> vector<2x128xf32>
    %c0_14 = arith.constant 0 : index
    %c0_15 = arith.constant 0 : index
    %51 = vector.load %arg6[%c0_14, %c0_15] : memref<2x128xf32, #tpu.memory_space<vmem>>, vector<2x128xf32>
    tpu.vector_store %arg6[%c0_14, %c0_15], %50 {strides = array<i32>} : memref<2x128xf32, #tpu.memory_space<vmem>>, vector<2x128xf32>,
    return
  }
  func.func @transform_0(%arg0: i32) -> (i32, i32) {
    %c0_i32 = arith.constant 0 : i32
    %c0_i32_0 = arith.constant 0 : i32
    return %c0_i32, %arg0 : i32, i32
  }
  func.func @transform_1(%arg0: i32) -> (i32, i32) {
    %c0_i32 = arith.constant 0 : i32
    %c0_i32_0 = arith.constant 0 : i32
    %c0_i32_1 = arith.constant 0 : i32
    return %c0_i32, %c0_i32_0 : i32, i32
  }
  func.func @transform_2(%arg0: i32) -> (i32, i32) {
    %c0_i32 = arith.constant 0 : i32
    %c0_i32_0 = arith.constant 0 : i32
    %c0_i32_1 = arith.constant 0 : i32
    return %c0_i32, %c0_i32_0 : i32, i32
  }
  func.func @transform_3(%arg0: i32) -> (i32, i32) {
    %c0_i32 = arith.constant 0 : i32
    %c0_i32_0 = arith.constant 0 : i32
    %c0_i32_1 = arith.constant 0 : i32
    return %c0_i32, %c0_i32_0 : i32, i32
  }
  func.func @transform_4(%arg0: i32) -> (i32, i32) {
    %c0_i32 = arith.constant 0 : i32
    %c0_i32_0 = arith.constant 0 : i32
    %c0_i32_1 = arith.constant 0 : i32
    return %c0_i32, %c0_i32_0 : i32, i32
  }
  func.func @transform_5(%arg0: i32) -> (i32, i32) {
    %c0_i32 = arith.constant 0 : i32
    %c0_i32_0 = arith.constant 0 : i32
    return %c0_i32, %arg0 : i32, i32
  }
}

</mosaic_0001>

<llo_original>
// kernel: policy_forward.1
$region0: #{policy_forward.1}
  #allocation0 [shape = 'u32[]', space=smem, size = 0x4, offset = 0x4, fixed_abs, tag = 'smem constant byte address 0x4 - core index']
  #allocation1 [shape = 'u32[144,128]{1,0:T(1,128)}', space=vmem, size = 0x12000, scoped, tag = 'internal scratch']
  #allocation2 [shape = 'f32[1,1]{1,0:T(1,128)S(6)}', space=smem, size = 0x200, scoped, tag = 'scoped memory for policy_forward.1']
  %s0 = inlined_call_operand.vmem [shape: f32[4,2], index: 0, kind: input, shape index: {}]
  %s1 = inlined_call_operand.vmem [shape: f32[32,4], index: 1, kind: input, shape index: {}]
  %s2 = inlined_call_operand.vmem [shape: f32[32,1], index: 2, kind: input, shape index: {}]
  %s3 = inlined_call_operand.vmem [shape: f32[32,1], index: 3, kind: input, shape index: {}]
  %s4 = inlined_call_operand.<no memory space> [shape: f32[1,1], index: 4, kind: input, shape index: {}]
  %s5 = inlined_call_operand.vmem [shape: f32[2,2], index: 5, kind: output, shape index: {}]
  %s6 = sld [smem:[#allocation0]]
  $region30: #{policy_forward.1} parent=0
    _
  %s8 = ssub.s32 1, %s6
  %s9 = scalar_select 0, %s8, %s6
  %10 = sst [smem:[#allocation2]] %s4
  // Predicated region
  $region2: #{policy_forward.1} parent=0 // pred_check
    _
  $region3: #{policy_forward.1} parent=0 // pred_check_branch
    %12 = sbr.rel (0) target = $region5
  $region4: #{policy_forward.1} parent=0 // pred_region
    _
  $region5: #{policy_forward.1} parent=0 // pred_fallthru
    _
  // Predicated region
  $region6: #{policy_forward.1} parent=0 // pred_check
    _
  $region7: #{policy_forward.1} parent=0 // pred_check_branch
    %14 = sbr.rel (0) target = $region9
  $region8: #{policy_forward.1} parent=0 // pred_region
    _
  $region9: #{policy_forward.1} parent=0 // pred_fallthru
    _
  // Predicated region
  $region10: #{policy_forward.1} parent=0 // pred_check
    _
  $region11: #{policy_forward.1} parent=0 // pred_check_branch
    %16 = sbr.rel (0) target = $region13
  $region12: #{policy_forward.1} parent=0 // pred_region
    _
  $region13: #{policy_forward.1} parent=0 // pred_fallthru
    _
  // Predicated region
  $region14: #{policy_forward.1} parent=0 // pred_check
    _
  $region15: #{policy_forward.1} parent=0 // pred_check_branch
    %18 = sbr.rel (0) target = $region17
  $region16: #{policy_forward.1} parent=0 // pred_region
    _
  $region17: #{policy_forward.1} parent=0 // pred_fallthru
    _
  // Predicated region
  $region18: #{policy_forward.1} parent=0 // pred_check
    _
  $region19: #{policy_forward.1} parent=0 // pred_check_branch
    %20 = sbr.rel (0) target = $region21
  $region20: #{policy_forward.1} parent=0 // pred_region
    _
  $region21: #{policy_forward.1} parent=0 // pred_fallthru
    _
  %v21 = vld [vmem:[%s0] sm:$0xf]
  %v22 = vld [vmem:[%s1] sm:$0xff]
  %v23 = vld [vmem:[%s1 + $0x8] sm:$0xff]
  %v24 = vld [vmem:[%s1 + $0x10] sm:$0xff]
  %v25 = vld [vmem:[%s1 + $0x18] sm:$0xff]
  %v26 = vld [vmem:[%s2] sm:$0xff]
  %v27 = vld [vmem:[%s2 + $0x8] sm:$0xff]
  %v28 = vld [vmem:[%s2 + $0x10] sm:$0xff]
  %v29 = vld [vmem:[%s2 + $0x18] sm:$0xff]
  %31 = vset.pattern.permute.xlu0 0
  %32 = vperm.xlu0 %31, %v22
  %v33 = vpop.permute.xlu0 %32
  %36 = vset.pattern.permute.xlu0 0
  %37 = vperm.xlu0 %36, %v23
  %v38 = vpop.permute.xlu0 %37
  %41 = vset.pattern.permute.xlu0 0
  %42 = vperm.xlu0 %41, %v24
  %v43 = vpop.permute.xlu0 %42
  %46 = vset.pattern.permute.xlu0 0
  %47 = vperm.xlu0 %46, %v25
  %v48 = vpop.permute.xlu0 %47
  %v50 = vlaneseq
  %v51 = vshrl.u32 %v50, 7
  %v52 = vsub.s32 0, %v51
  %v53 = vrot.slane %v21, %v52
  %v54 = vmul.f32 %v33, %v53
  %v55 = vmul.f32 %v38, %v53
  %v56 = vmul.f32 %v43, %v53
  %v57 = vmul.f32 %v48, %v53
  %59 = vset.pattern.permute.xlu0 0
  %60 = vperm.xlu0 %59, %v26
  %v61 = vpop.permute.xlu0 %60
  %64 = vset.pattern.permute.xlu0 0
  %65 = vperm.xlu0 %64, %v27
  %v66 = vpop.permute.xlu0 %65
  %69 = vset.pattern.permute.xlu0 0
  %70 = vperm.xlu0 %69, %v28
  %v71 = vpop.permute.xlu0 %70
  %74 = vset.pattern.permute.xlu0 0
  %75 = vperm.xlu0 %74, %v29
  %v76 = vpop.permute.xlu0 %75
  %v78 = vadd.f32 %v61, %v54
  %v79 = vadd.f32 %v66, %v55
  %v80 = vadd.f32 %v71, %v56
  %v81 = vadd.f32 %v76, %v57
  %82 = vset.pattern.permute.xlu0 1
  %83 = vperm.xlu0 %82, %v22
  %v84 = vpop.permute.xlu0 %83
  %86 = vset.pattern.permute.xlu0 1
  %87 = vperm.xlu0 %86, %v23
  %v88 = vpop.permute.xlu0 %87
  %90 = vset.pattern.permute.xlu0 1
  %91 = vperm.xlu0 %90, %v24
  %v92 = vpop.permute.xlu0 %91
  %94 = vset.pattern.permute.xlu0 1
  %95 = vperm.xlu0 %94, %v25
  %v96 = vpop.permute.xlu0 %95
  %v98 = vlaneseq
  %v99 = vshrl.u32 %v98, 7
  %v100 = vsub.s32 1, %v99
  %v101 = vrot.slane %v21, %v100
  %v102 = vmul.f32 %v84, %v101
  %v103 = vmul.f32 %v88, %v101
  %v104 = vmul.f32 %v92, %v101
  %v105 = vmul.f32 %v96, %v101
  %v106 = vadd.f32 %v78, %v102
  %v107 = vadd.f32 %v79, %v103
  %v108 = vadd.f32 %v80, %v104
  %v109 = vadd.f32 %v81, %v105
  %110 = vset.pattern.permute.xlu0 2
  %111 = vperm.xlu0 %110, %v22
  %v112 = vpop.permute.xlu0 %111
  %114 = vset.pattern.permute.xlu0 2
  %115 = vperm.xlu0 %114, %v23
  %v116 = vpop.permute.xlu0 %115
  %118 = vset.pattern.permute.xlu0 2
  %119 = vperm.xlu0 %118, %v24
  %v120 = vpop.permute.xlu0 %119
  %122 = vset.pattern.permute.xlu0 2
  %123 = vperm.xlu0 %122, %v25
  %v124 = vpop.permute.xlu0 %123
  %v126 = vlaneseq
  %v127 = vshrl.u32 %v126, 7
  %v128 = vsub.s32 2, %v127
  %v129 = vrot.slane %v21, %v128
  %v130 = vmul.f32 %v112, %v129
  %v131 = vmul.f32 %v116, %v129
  %v132 = vmul.f32 %v120, %v129
  %v133 = vmul.f32 %v124, %v129
  %v134 = vadd.f32 %v106, %v130
  %v135 = vadd.f32 %v107, %v131
  %v136 = vadd.f32 %v108, %v132
  %v137 = vadd.f32 %v109, %v133
  %138 = vset.pattern.permute.xlu0 3
  %139 = vperm.xlu0 %138, %v22
  %v140 = vpop.permute.xlu0 %139
  %142 = vset.pattern.permute.xlu0 3
  %143 = vperm.xlu0 %142, %v23
  %v144 = vpop.permute.xlu0 %143
  %146 = vset.pattern.permute.xlu0 3
  %147 = vperm.xlu0 %146, %v24
  %v148 = vpop.permute.xlu0 %147
  %150 = vset.pattern.permute.xlu0 3
  %151 = vperm.xlu0 %150, %v25
  %v152 = vpop.permute.xlu0 %151
  %v154 = vlaneseq
  %v155 = vshrl.u32 %v154, 7
  %v156 = vsub.s32 3, %v155
  %v157 = vrot.slane %v21, %v156
  %v158 = vmul.f32 %v140, %v157
  %v159 = vmul.f32 %v144, %v157
  %v160 = vmul.f32 %v148, %v157
  %v161 = vmul.f32 %v152, %v157
  %v162 = vadd.f32 %v134, %v158
  %v163 = vadd.f32 %v135, %v159
  %v164 = vadd.f32 %v136, %v160
  %v165 = vadd.f32 %v137, %v161
  %v166 = vmax.f32 %v162, 0.0
  %v167 = vmax.f32 %v163, 0.0
  %v168 = vmax.f32 %v164, 0.0
  %v169 = vmax.f32 %v165, 0.0
  %v170 = vld [vmem:[%s3] sm:$0xff]
  %v171 = vld [vmem:[%s3 + $0x8] sm:$0xff]
  %v172 = vld [vmem:[%s3 + $0x10] sm:$0xff]
  %v173 = vld [vmem:[%s3 + $0x18] sm:$0xff]
  %175 = vset.pattern.permute.xlu0 0
  %176 = vperm.xlu0 %175, %v170
  %v177 = vpop.permute.xlu0 %176
  %180 = vset.pattern.permute.xlu0 0
  %181 = vperm.xlu0 %180, %v171
  %v182 = vpop.permute.xlu0 %181
  %185 = vset.pattern.permute.xlu0 0
  %186 = vperm.xlu0 %185, %v172
  %v187 = vpop.permute.xlu0 %186
  %190 = vset.pattern.permute.xlu0 0
  %191 = vperm.xlu0 %190, %v173
  %v192 = vpop.permute.xlu0 %191
  %v194 = vmul.f32 %v177, %v166
  %v195 = vmul.f32 %v182, %v167
  %v196 = vmul.f32 %v187, %v168
  %v197 = vmul.f32 %v192, %v169
  %v198 = vadd.f32 %v194, %v195
  %v199 = vadd.f32 %v198, %v196
  %v200 = vadd.f32 %v199, %v197
  %v201 = vrot.slane %v200, 4
  %v202 = vadd.f32 %v200, %v201
  %v203 = vrot.slane %v202, 2
  %v204 = vadd.f32 %v202, %v203
  %v205 = vrot.slane %v204, 1
  %v206 = vadd.f32 %v204, %v205
  %s207 = sld [smem:[#allocation2]]
  %v208 = vstv %s207
  %v209 = vadd.f32 %v206, %v208
  %v210 = vsub.f32 0.0, %v209
  %v211 = vmul.f32 %v210, 1.442695
  %v212 = vpow.pop %v211
  %v213 = vadd.f32 %v212, 1.0
  %v214 = vrcp.pop %v213
  %v215 = vmul.f32 %v213, %v214
  %v216 = vsub.f32 2.0, %v215
  %v217 = vmul.f32 %v214, %v216
  %v218 = vsub.f32 1.0, %v217
  %vm219 = vcmask 1040384
  %v220 = vsel %vm219, %v217, %v218
  %221 = vst [vmem:[%s5] sm:$0x3] %v220
  // Predicated region
  $region22: #{policy_forward.1} parent=0 // pred_check
    _
  $region23: #{policy_forward.1} parent=0 // pred_check_branch
    %223 = sbr.rel (0) target = $region25
  $region24: #{policy_forward.1} parent=0 // pred_region
    _
  $region25: #{policy_forward.1} parent=0 // pred_fallthru
    _
  // Predicated region
  $region26: #{policy_forward.1} parent=0 // pred_check
    _
  $region27: #{policy_forward.1} parent=0 // pred_check_branch
    %225 = sbr.rel (0) target = $region29
  $region28: #{policy_forward.1} parent=0 // pred_region
    _
  $region29: #{policy_forward.1} parent=0 // pred_fallthru
    _

</llo_original>
